<compile_context>
chip_gen: v7x
topology: tpu7x:2x2x1
jax: 0.10.0
libtpu: 0.0.40
codegen_flags: <defaults>
</compile_context>

<pallas_src>
import jax
import jax.numpy as jnp
import numpy as np
from jax.experimental import pallas as pl
from jax.experimental.pallas import tpu as pltpu


def _basic_block_kernel(x_ref, w1_ref, b1_ref, w2_ref, b2_ref, o_ref):
    # x_ref: (B, C, L) block — B batch elements, channels-first, lane dim = L.
    B, C, L = x_ref.shape
    zcol = jnp.zeros((C, 1), jnp.bfloat16)

    def leaky_relu(v):
        return jnp.where(v > 0, v, 0.01 * v)

    def conv3(chunks, w_ref):
        # chunks: list of B (C, L) bf16 arrays (one per batch element).
        # Conv1d k=3, pad=1, stride=1 as ONE matmul:
        #   out[co, b*L + l] = sum_{k, ci} w[co, k*C+ci] * band_k[b][ci, l]
        # where band_k is the input shifted by (k-1) along L, zero-padded per
        # batch element (so padding never leaks across the batch seams).
        tap0 = [jnp.concatenate([zcol, c[:, : L - 1]], axis=1) for c in chunks]  # x[l-1]
        tap2 = [jnp.concatenate([c[:, 1:], zcol], axis=1) for c in chunks]       # x[l+1]
        xcat = jnp.concatenate(
            [jnp.concatenate(tap0, axis=1),      # (C, B*L)  k = 0
             jnp.concatenate(chunks, axis=1),    # (C, B*L)  k = 1
             jnp.concatenate(tap2, axis=1)],     # (C, B*L)  k = 2
            axis=0)                              # (3*C, B*L), bf16, lives in vregs
        return jnp.dot(w_ref[...], xcat,
                       preferred_element_type=jnp.float32)   # (C, B*L) f32

    # Residual kept in f32; bf16 only for the MXU operands.
    x_f32 = [x_ref[b].astype(jnp.float32) for b in range(B)]          # B x (C, L)

    h = leaky_relu(conv3([v.astype(jnp.bfloat16) for v in x_f32], w1_ref)
                   + b1_ref[...])                                      # (C, B*L)
    h2 = conv3([h[:, b * L:(b + 1) * L].astype(jnp.bfloat16) for b in range(B)],
               w2_ref) + b2_ref[...]                                   # (C, B*L)

    for b in range(B):
        o_ref[b] = leaky_relu(h2[:, b * L:(b + 1) * L]
                              + x_f32[b]).astype(o_ref.dtype)


@jax.jit
def basic_block_forward(x_ncl, w1, g1, beta1, m1, v1, w2, g2, beta2, m2, v2,
                        eps=1e-5):
    """x_ncl: (N, C, L) float32 (PyTorch Conv1d layout).  Weights w*: (3, Cin, Cout)."""
    N, C, L = x_ncl.shape
    # This kernel implements the stride=1, Cin==Cout, downsample=None BasicBlock only.
    assert w1.shape == (3, C, C) and w2.shape == (3, C, C), \
        "BasicBlock kernel requires stride=1, Cin==Cout, downsample=None"

    # Fold eval-mode BatchNorm1d into the conv weights (scale) + a bias add.
    s1 = g1 / jnp.sqrt(v1 + eps)
    b1 = beta1 - m1 * s1
    s2 = g2 / jnp.sqrt(v2 + eps)
    b2 = beta2 - m2 * s2
    w1f = w1 * s1[None, None, :]                 # (K, Cin, Cout) scaled per Cout
    w2f = w2 * s2[None, None, :]

    # (K, Cin, Cout) -> (Cout, K*Cin), bf16 operands for the MXU.
    # (For best layout keep C a multiple of the bf16 sublane pack of 16.)
    w1r = jnp.transpose(w1f, (2, 0, 1)).reshape(C, 3 * C).astype(jnp.bfloat16)
    w2r = jnp.transpose(w2f, (2, 0, 1)).reshape(C, 3 * C).astype(jnp.bfloat16)

    # Batch several elements per grid step so the matmul RHS / output lane width
    # (bt*L) is >= 256 and per-step pipeline overhead is amortized.
    bt = max(1, min(N, pl.cdiv(256, L)))
    n_grid = pl.cdiv(N, bt)
    Np = bt * n_grid
    x_in = jnp.pad(x_ncl, ((0, Np - N), (0, 0), (0, 0))) if Np != N else x_ncl

    # Explicit scoped-VMEM limit (review: size for v7x's 64 MiB physical VMEM).
    vmem_limit = int(min(48 * 2**20,
                         max(8 * 2**20, 16 * bt * C * L * x_ncl.dtype.itemsize)))

    out = pl.pallas_call(
        _basic_block_kernel,
        out_shape=jax.ShapeDtypeStruct((Np, C, L), x_ncl.dtype),
        grid=(n_grid,),
        in_specs=[
            pl.BlockSpec((bt, C, L), lambda n: (n, 0, 0)),   # x (bt batch elements)
            pl.BlockSpec((C, 3 * C), lambda n: (0, 0)),      # conv1 weights (BN1 folded)
            pl.BlockSpec((C, 1), lambda n: (0, 0)),          # bn1 bias
            pl.BlockSpec((C, 3 * C), lambda n: (0, 0)),      # conv2 weights (BN2 folded)
            pl.BlockSpec((C, 1), lambda n: (0, 0)),          # bn2 bias
        ],
        out_specs=pl.BlockSpec((bt, C, L), lambda n: (n, 0, 0)),
        compiler_params=pltpu.CompilerParams(
            dimension_semantics=("parallel",),
            vmem_limit_bytes=vmem_limit),
    )(x_in, w1r, b1.reshape(C, 1), w2r, b2.reshape(C, 1))

    return out[:N] if Np != N else out


def _reference_forward(x_ncl, w1, g1, beta1, m1, v1, w2, g2, beta2, m2, v2,
                       eps=1e-5):
    """Pure-JAX reference mirroring the PyTorch BasicBlock (eval-mode BN)."""
    def conv(x, w):  # w: (3, Cin, Cout) -> lax OIH = (Cout, Cin, 3)
        w_oik = jnp.transpose(w, (2, 1, 0))
        return jax.lax.conv_general_dilated(
            x, w_oik, window_strides=(1,), padding=((1, 1),),
            dimension_numbers=("NCH", "OIH", "NCH"))

    def bn(x, g, b, m, v):
        return (x - m[None, :, None]) / jnp.sqrt(v[None, :, None] + eps) \
               * g[None, :, None] + b[None, :, None]

    def lrelu(x):
        return jnp.where(x > 0, x, 0.01 * x)

    h = lrelu(bn(conv(x_ncl, w1), g1, beta1, m1, v1))
    h = bn(conv(h, w2), g2, beta2, m2, v2)
    return lrelu(h + x_ncl)


if __name__ == "__main__":
    key = jax.random.PRNGKey(0)
    # Lane-dense small test shapes: L a multiple of 128, C a multiple of 16,
    # N > batch_tile so the parallel grid has >= 2 steps (feeds both v7x TCs).
    N, C, L = 4, 16, 128

    ks = jax.random.split(key, 8)
    x = jax.random.normal(ks[0], (N, C, L), jnp.float32)

    # Deterministic synthetic parameters (Conv1d weights stored as (K, Cin, Cout)).
    w1 = jax.random.normal(ks[1], (3, C, C), jnp.float32) * 0.1
    w2 = jax.random.normal(ks[2], (3, C, C), jnp.float32) * 0.1
    g1 = 1.0 + 0.1 * jax.random.normal(ks[3], (C,), jnp.float32)
    beta1 = 0.1 * jax.random.normal(ks[4], (C,), jnp.float32)
    m1 = 0.1 * jax.random.normal(ks[5], (C,), jnp.float32)
    v1 = jnp.abs(jax.random.normal(ks[6], (C,), jnp.float32)) + 0.5
    g2 = jnp.ones((C,), jnp.float32)
    beta2 = jnp.zeros((C,), jnp.float32)
    m2 = 0.05 * jnp.arange(C, dtype=jnp.float32)
    v2 = jnp.ones((C,), jnp.float32) + 0.25

    out = basic_block_forward(x, w1, g1, beta1, m1, v1, w2, g2, beta2, m2, v2)
    out = jax.block_until_ready(out)

    ref = _reference_forward(x, w1, g1, beta1, m1, v1, w2, g2, beta2, m2, v2)
    # bf16 MXU operands with f32 accumulation -> slightly looser tolerance.
    np.testing.assert_allclose(np.asarray(out), np.asarray(ref),
                               rtol=2e-2, atol=2e-2)

    print("KERNEL_OK")
</pallas_src>

<mosaic_0001>
module attributes {stable_mosaic.version = 11 : i64} {
  func.func @_basic_block_kernel(%arg0: i32, %arg1: memref<2x16x128xf32, #tpu.memory_space<vmem>>, %arg2: memref<16x48xbf16, #tpu.memory_space<vmem>>, %arg3: memref<16x1xf32, #tpu.memory_space<vmem>>, %arg4: memref<16x48xbf16, #tpu.memory_space<vmem>>, %arg5: memref<16x1xf32, #tpu.memory_space<vmem>>, %arg6: memref<2x16x128xf32, #tpu.memory_space<vmem>>) attributes {dimension_semantics = [#tpu.dimension_semantics<parallel>], iteration_bounds = array<i64: 2>, scalar_prefetch = 0 : i64, scratch_operands = 0 : i64, tpu.core_type = #tpu.core_type<tc>, window_params = [{transform_indices = @transform_0, window_bounds = array<i64: 2, 16, 128>}, {pipeline_mode = #tpu.pipeline_mode<synchronous>, transform_indices = @transform_1, window_bounds = array<i64: 16, 48>}, {pipeline_mode = #tpu.pipeline_mode<synchronous>, transform_indices = @transform_2, window_bounds = array<i64: 16, 1>}, {pipeline_mode = #tpu.pipeline_mode<synchronous>, transform_indices = @transform_3, window_bounds = array<i64: 16, 48>}, {pipeline_mode = #tpu.pipeline_mode<synchronous>, transform_indices = @transform_4, window_bounds = array<i64: 16, 1>}, {transform_indices = @transform_5, window_bounds = array<i64: 2, 16, 128>}]} {
    %cst = arith.constant 0.000000e+00 : bf16
    %0 = vector.broadcast %cst : bf16 to vector<16x1xbf16>
    %c0 = arith.constant 0 : index
    %c0_0 = arith.constant 0 : index
    %c0_1 = arith.constant 0 : index
    %1 = vector.load %arg1[%c0, %c0_0, %c0_1] : memref<2x16x128xf32, #tpu.memory_space<vmem>>, vector<1x16x128xf32>
    %2 = vector.shape_cast %1 : vector<1x16x128xf32> to vector<16x128xf32>
    %c1 = arith.constant 1 : index
    %c0_2 = arith.constant 0 : index
    %c0_3 = arith.constant 0 : index
    %3 = vector.load %arg1[%c1, %c0_2, %c0_3] : memref<2x16x128xf32, #tpu.memory_space<vmem>>, vector<1x16x128xf32>
    %4 = vector.shape_cast %3 : vector<1x16x128xf32> to vector<16x128xf32>
    %5 = arith.truncf %2 : vector<16x128xf32> to vector<16x128xbf16>
    %6 = arith.truncf %4 : vector<16x128xf32> to vector<16x128xbf16>
    %7 = vector.extract_strided_slice %5 {offsets = [0, 0], sizes = [16, 127], strides = [1, 1]} : vector<16x128xbf16> to vector<16x127xbf16>
    %8 = tpu.concatenate %0, %7 in 1 : vector<16x1xbf16>, vector<16x127xbf16> -> vector<16x128xbf16>
    %9 = vector.extract_strided_slice %6 {offsets = [0, 0], sizes = [16, 127], strides = [1, 1]} : vector<16x128xbf16> to vector<16x127xbf16>
    %10 = tpu.concatenate %0, %9 in 1 : vector<16x1xbf16>, vector<16x127xbf16> -> vector<16x128xbf16>
    %11 = vector.extract_strided_slice %5 {offsets = [0, 1], sizes = [16, 127], strides = [1, 1]} : vector<16x128xbf16> to vector<16x127xbf16>
    %12 = tpu.concatenate %11, %0 in 1 : vector<16x127xbf16>, vector<16x1xbf16> -> vector<16x128xbf16>
    %13 = vector.extract_strided_slice %6 {offsets = [0, 1], sizes = [16, 127], strides = [1, 1]} : vector<16x128xbf16> to vector<16x127xbf16>
    %14 = tpu.concatenate %13, %0 in 1 : vector<16x127xbf16>, vector<16x1xbf16> -> vector<16x128xbf16>
    %15 = tpu.concatenate %8, %10 in 1 : vector<16x128xbf16>, vector<16x128xbf16> -> vector<16x256xbf16>
    %16 = tpu.concatenate %5, %6 in 1 : vector<16x128xbf16>, vector<16x128xbf16> -> vector<16x256xbf16>
    %17 = tpu.concatenate %12, %14 in 1 : vector<16x128xbf16>, vector<16x128xbf16> -> vector<16x256xbf16>
    %18 = tpu.concatenate %15, %16, %17 in 0 : vector<16x256xbf16>, vector<16x256xbf16>, vector<16x256xbf16> -> vector<48x256xbf16>
    %c0_4 = arith.constant 0 : index
    %c0_5 = arith.constant 0 : index
    %19 = vector.load %arg2[%c0_4, %c0_5] : memref<16x48xbf16, #tpu.memory_space<vmem>>, vector<16x48xbf16>
    %cst_6 = arith.constant dense<0.000000e+00> : vector<16x256xf32>
    %20 = tpu.matmul %19, %18, %cst_6 {dimension_numbers = #tpu.dot_dimension_numbers<[1], [0], [0], [1], [0, 0, 1, 1], [], []>} : vector<16x48xbf16>, vector<48x256xbf16>, vector<16x256xf32> -> vector<16x256xf32>
    %c0_7 = arith.constant 0 : index
    %c0_8 = arith.constant 0 : index
    %21 = vector.load %arg3[%c0_7, %c0_8] : memref<16x1xf32, #tpu.memory_space<vmem>>, vector<16x1xf32>
    %22 = vector.broadcast %21 : vector<16x1xf32> to vector<16x256xf32>
    %23 = arith.addf %20, %22 : vector<16x256xf32>
    %cst_9 = arith.constant 0.000000e+00 : f32
    %24 = vector.broadcast %cst_9 : f32 to vector<16x256xf32>
    %25 = arith.cmpf ogt, %23, %24 : vector<16x256xf32>
    %cst_10 = arith.constant 0.00999999977 : f32
    %26 = vector.broadcast %cst_10 : f32 to vector<16x256xf32>
    %27 = arith.mulf %26, %23 : vector<16x256xf32>
    %28 = arith.select %25, %23, %27 : vector<16x256xi1>, vector<16x256xf32>
    %29 = vector.extract_strided_slice %28 {offsets = [0, 0], sizes = [16, 128], strides = [1, 1]} : vector<16x256xf32> to vector<16x128xf32>
    %30 = arith.truncf %29 : vector<16x128xf32> to vector<16x128xbf16>
    %31 = vector.extract_strided_slice %28 {offsets = [0, 128], sizes = [16, 128], strides = [1, 1]} : vector<16x256xf32> to vector<16x128xf32>
    %32 = arith.truncf %31 : vector<16x128xf32> to vector<16x128xbf16>
    %33 = vector.extract_strided_slice %30 {offsets = [0, 0], sizes = [16, 127], strides = [1, 1]} : vector<16x128xbf16> to vector<16x127xbf16>
    %34 = tpu.concatenate %0, %33 in 1 : vector<16x1xbf16>, vector<16x127xbf16> -> vector<16x128xbf16>
    %35 = vector.extract_strided_slice %32 {offsets = [0, 0], sizes = [16, 127], strides = [1, 1]} : vector<16x128xbf16> to vector<16x127xbf16>
    %36 = tpu.concatenate %0, %35 in 1 : vector<16x1xbf16>, vector<16x127xbf16> -> vector<16x128xbf16>
    %37 = vector.extract_strided_slice %30 {offsets = [0, 1], sizes = [16, 127], strides = [1, 1]} : vector<16x128xbf16> to vector<16x127xbf16>
    %38 = tpu.concatenate %37, %0 in 1 : vector<16x127xbf16>, vector<16x1xbf16> -> vector<16x128xbf16>
    %39 = vector.extract_strided_slice %32 {offsets = [0, 1], sizes = [16, 127], strides = [1, 1]} : vector<16x128xbf16> to vector<16x127xbf16>
    %40 = tpu.concatenate %39, %0 in 1 : vector<16x127xbf16>, vector<16x1xbf16> -> vector<16x128xbf16>
    %41 = tpu.concatenate %34, %36 in 1 : vector<16x128xbf16>, vector<16x128xbf16> -> vector<16x256xbf16>
    %42 = tpu.concatenate %30, %32 in 1 : vector<16x128xbf16>, vector<16x128xbf16> -> vector<16x256xbf16>
    %43 = tpu.concatenate %38, %40 in 1 : vector<16x128xbf16>, vector<16x128xbf16> -> vector<16x256xbf16>
    %44 = tpu.concatenate %41, %42, %43 in 0 : vector<16x256xbf16>, vector<16x256xbf16>, vector<16x256xbf16> -> vector<48x256xbf16>
    %c0_11 = arith.constant 0 : index
    %c0_12 = arith.constant 0 : index
    %45 = vector.load %arg4[%c0_11, %c0_12] : memref<16x48xbf16, #tpu.memory_space<vmem>>, vector<16x48xbf16>
    %cst_13 = arith.constant dense<0.000000e+00> : vector<16x256xf32>
    %46 = tpu.matmul %45, %44, %cst_13 {dimension_numbers = #tpu.dot_dimension_numbers<[1], [0], [0], [1], [0, 0, 1, 1], [], []>} : vector<16x48xbf16>, vector<48x256xbf16>, vector<16x256xf32> -> vector<16x256xf32>
    %c0_14 = arith.constant 0 : index
    %c0_15 = arith.constant 0 : index
    %47 = vector.load %arg5[%c0_14, %c0_15] : memref<16x1xf32, #tpu.memory_space<vmem>>, vector<16x1xf32>
    %48 = vector.broadcast %47 : vector<16x1xf32> to vector<16x256xf32>
    %49 = arith.addf %46, %48 : vector<16x256xf32>
    %50 = vector.extract_strided_slice %49 {offsets = [0, 0], sizes = [16, 128], strides = [1, 1]} : vector<16x256xf32> to vector<16x128xf32>
    %51 = arith.addf %50, %2 : vector<16x128xf32>
    %cst_16 = arith.constant 0.000000e+00 : f32
    %52 = vector.broadcast %cst_16 : f32 to vector<16x128xf32>
    %53 = arith.cmpf ogt, %51, %52 : vector<16x128xf32>
    %cst_17 = arith.constant 0.00999999977 : f32
    %54 = vector.broadcast %cst_17 : f32 to vector<16x128xf32>
    %55 = arith.mulf %54, %51 : vector<16x128xf32>
    %56 = arith.select %53, %51, %55 : vector<16x128xi1>, vector<16x128xf32>
    %c0_18 = arith.constant 0 : index
    %c0_19 = arith.constant 0 : index
    %c0_20 = arith.constant 0 : index
    %57 = vector.load %arg6[%c0_18, %c0_19, %c0_20] : memref<2x16x128xf32, #tpu.memory_space<vmem>>, vector<1x16x128xf32>
    %58 = vector.shape_cast %57 : vector<1x16x128xf32> to vector<16x128xf32>
    %59 = vector.shape_cast %56 : vector<16x128xf32> to vector<1x16x128xf32>
    tpu.vector_store %arg6[%c0_18, %c0_19, %c0_20], %59 {strides = array<i32>} : memref<2x16x128xf32, #tpu.memory_space<vmem>>, vector<1x16x128xf32>,
    %60 = vector.extract_strided_slice %49 {offsets = [0, 128], sizes = [16, 128], strides = [1, 1]} : vector<16x256xf32> to vector<16x128xf32>
    %61 = arith.addf %60, %4 : vector<16x128xf32>
    %cst_21 = arith.constant 0.000000e+00 : f32
    %62 = vector.broadcast %cst_21 : f32 to vector<16x128xf32>
    %63 = arith.cmpf ogt, %61, %62 : vector<16x128xf32>
    %cst_22 = arith.constant 0.00999999977 : f32
    %64 = vector.broadcast %cst_22 : f32 to vector<16x128xf32>
    %65 = arith.mulf %64, %61 : vector<16x128xf32>
    %66 = arith.select %63, %61, %65 : vector<16x128xi1>, vector<16x128xf32>
    %c1_23 = arith.constant 1 : index
    %c0_24 = arith.constant 0 : index
    %c0_25 = arith.constant 0 : index
    %67 = vector.load %arg6[%c1_23, %c0_24, %c0_25] : memref<2x16x128xf32, #tpu.memory_space<vmem>>, vector<1x16x128xf32>
    %68 = vector.shape_cast %67 : vector<1x16x128xf32> to vector<16x128xf32>
    %69 = vector.shape_cast %66 : vector<16x128xf32> to vector<1x16x128xf32>
    tpu.vector_store %arg6[%c1_23, %c0_24, %c0_25], %69 {strides = array<i32>} : memref<2x16x128xf32, #tpu.memory_space<vmem>>, vector<1x16x128xf32>,
    return
  }
  func.func @transform_0(%arg0: i32) -> (i32, i32, i32) {
    %c0_i32 = arith.constant 0 : i32
    %c0_i32_0 = arith.constant 0 : i32
    %c0_i32_1 = arith.constant 0 : i32
    return %arg0, %c0_i32, %c0_i32_0 : i32, i32, i32
  }
  func.func @transform_1(%arg0: i32) -> (i32, i32) {
    %c0_i32 = arith.constant 0 : i32
    %c0_i32_0 = arith.constant 0 : i32
    %c0_i32_1 = arith.constant 0 : i32
    return %c0_i32, %c0_i32_0 : i32, i32
  }
  func.func @transform_2(%arg0: i32) -> (i32, i32) {
    %c0_i32 = arith.constant 0 : i32
    %c0_i32_0 = arith.constant 0 : i32
    %c0_i32_1 = arith.constant 0 : i32
    return %c0_i32, %c0_i32_0 : i32, i32
  }
  func.func @transform_3(%arg0: i32) -> (i32, i32) {
    %c0_i32 = arith.constant 0 : i32
    %c0_i32_0 = arith.constant 0 : i32
    %c0_i32_1 = arith.constant 0 : i32
    return %c0_i32, %c0_i32_0 : i32, i32
  }
  func.func @transform_4(%arg0: i32) -> (i32, i32) {
    %c0_i32 = arith.constant 0 : i32
    %c0_i32_0 = arith.constant 0 : i32
    %c0_i32_1 = arith.constant 0 : i32
    return %c0_i32, %c0_i32_0 : i32, i32
  }
  func.func @transform_5(%arg0: i32) -> (i32, i32, i32) {
    %c0_i32 = arith.constant 0 : i32
    %c0_i32_0 = arith.constant 0 : i32
    %c0_i32_1 = arith.constant 0 : i32
    return %arg0, %c0_i32, %c0_i32_0 : i32, i32, i32
  }
}

</mosaic_0001>

<llo_original>
// kernel: basic_block_forward.1
$region0: #{basic_block_forward.1}
  #allocation0 [shape = 'u32[]', space=smem, size = 0x4, offset = 0x4, fixed_abs, tag = 'smem constant byte address 0x4 - core index']
  #allocation1 [shape = 'u32[144,128]{1,0:T(1,128)}', space=vmem, size = 0x12000, scoped, tag = 'internal scratch']
  %s0 = inlined_call_operand.vmem [shape: f32[4,16,128], index: 0, kind: input, shape index: {}]
  %s1 = inlined_call_operand.vmem [shape: bf16[16,48], index: 1, kind: input, shape index: {}]
  %s2 = inlined_call_operand.vmem [shape: f32[16,1], index: 2, kind: input, shape index: {}]
  %s3 = inlined_call_operand.vmem [shape: bf16[16,48], index: 3, kind: input, shape index: {}]
  %s4 = inlined_call_operand.vmem [shape: f32[16,1], index: 4, kind: input, shape index: {}]
  %s5 = inlined_call_operand.hbm [shape: f32[4,16,128], index: 5, kind: output, shape index: {}]
  %s6 = sld [smem:[#allocation0]]
  $region53: #{basic_block_forward.1} parent=0
    _
  %s8 = ssub.s32 1, %s6
  %s9 = scalar_select 0, %s8, %s6
  $region1: #{basic_block_forward.1} parent=0
    #allocation2 [shape = 'u8[32768]{0}', space=vmem, size = 0x8000, scoped, tag = 'output window, operand 0']
    #allocation3 [shape = 's32[2]{0}', space=sflag, size = 0x8, scoped, tag = 'scoped memory for basic_block_forward.1']
    %10 = vsyncpa [#allocation3], 0
    %s11 = scalar_lea.sflag [#allocation3], 1
    %12 = vsyncpa %s11, 0
    loop: start=0, step=1, limit=4
    $region2: #{basic_block_forward.1} parent=1 // loop_pre_header
      _
    $region3: #{basic_block_forward.1} parent=1 // loop_header
      %s14 = sphi 0, %s18
      %p15 = scmp.ge.s32.totalorder %s14, 4
      %s24 = sphi 0, %s26
      %s27 = sphi 0, %s24
      %s28 = sphi 0, %s27
      %s44 = sphi 0, %s28
      %s48 = sphi 0, %s48
      %s50 = sphi 0, %s48
      %s51 = sphi 0, %s50
      %s65 = sphi 0, %s51
      %s69 = sphi 0, %s69
      %s71 = sphi 0, %s69
      %s72 = sphi 0, %s71
      %s86 = sphi 0, %s72
      %s90 = sphi 0, %s90
      %s92 = sphi 0, %s90
      %s93 = sphi 0, %s92
      %s107 = sphi 0, %s93
      %s111 = sphi 0, %s111
      %s113 = sphi 0, %s111
      %s114 = sphi 0, %s113
      %s128 = sphi 0, %s114
      %s134 = sphi 0, %s136
      %s137 = sphi 0, %s134
      %s138 = sphi 0, %s137
      %s154 = sphi 0, %s138
    $region4: #{basic_block_forward.1} parent=1 // loop_header_branch
      %17 = sbr.rel (%p15) target = $region8
    $region5: #{basic_block_forward.1} parent=1 // loop_body
      %s19 = ssub.s32 %s14, 1
      %s20 = ssub.s32 %s14, 2
      %s21 = sadd.s32 %s14, 1
      %s22 = ssub.s32 %s14, %s21
      %p23 = scmp.eq.s32.totalorder %s22, 0
      %s25 = sadd.s32 %s24, 1
      %s26 = scalar_select %p23, %s24, %s25
      %p29 = pneg %p23
      %p30 = scmp.eq.s32.totalorder %s14, 1
      %p31 = por %p29, %p30
      %p32 = scmp.ne.s32.totalorder %s24, %s27
      %p33 = scmp.eq.s32.totalorder %s14, 0
      %p34 = por %p32, %p33
      %p35 = scmp.ne.s32.totalorder %s24, %s27
      %p36 = scmp.eq.s32.totalorder %s19, 1
      %p37 = por %p35, %p36
      %p38 = scmp.ne.s32.totalorder %s27, %s28
      %p39 = scmp.eq.s32.totalorder %s19, 0
      %p40 = por %p38, %p39
      %p41 = scmp.ne.s32.totalorder %s27, %s28
      %p42 = scmp.eq.s32.totalorder %s20, 1
      %p43 = por %p41, %p42
      %p45 = scmp.ne.s32.totalorder %s28, %s44
      %p46 = scmp.eq.s32.totalorder %s20, 0
      %p47 = por %p45, %p46
      %s49 = sadd.s32 %s48, 1
      %p52 = scmp.eq.s32.totalorder %s14, 1
      %p53 = scmp.ne.s32.totalorder %s48, %s50
      %p54 = scmp.eq.s32.totalorder %s14, 0
      %p55 = por %p53, %p54
      %p56 = scmp.ne.s32.totalorder %s48, %s50
      %p57 = scmp.eq.s32.totalorder %s19, 1
      %p58 = por %p56, %p57
      %p59 = scmp.ne.s32.totalorder %s50, %s51
      %p60 = scmp.eq.s32.totalorder %s19, 0
      %p61 = por %p59, %p60
      %p62 = scmp.ne.s32.totalorder %s50, %s51
      %p63 = scmp.eq.s32.totalorder %s20, 1
      %p64 = por %p62, %p63
      %p66 = scmp.ne.s32.totalorder %s51, %s65
      %p67 = scmp.eq.s32.totalorder %s20, 0
      %p68 = por %p66, %p67
      %s70 = sadd.s32 %s69, 1
      %p73 = scmp.eq.s32.totalorder %s14, 1
      %p74 = scmp.ne.s32.totalorder %s69, %s71
      %p75 = scmp.eq.s32.totalorder %s14, 0
      %p76 = por %p74, %p75
      %p77 = scmp.ne.s32.totalorder %s69, %s71
      %p78 = scmp.eq.s32.totalorder %s19, 1
      %p79 = por %p77, %p78
      %p80 = scmp.ne.s32.totalorder %s71, %s72
      %p81 = scmp.eq.s32.totalorder %s19, 0
      %p82 = por %p80, %p81
      %p83 = scmp.ne.s32.totalorder %s71, %s72
      %p84 = scmp.eq.s32.totalorder %s20, 1
      %p85 = por %p83, %p84
      %p87 = scmp.ne.s32.totalorder %s72, %s86
      %p88 = scmp.eq.s32.totalorder %s20, 0
      %p89 = por %p87, %p88
      %s91 = sadd.s32 %s90, 1
      %p94 = scmp.eq.s32.totalorder %s14, 1
      %p95 = scmp.ne.s32.totalorder %s90, %s92
      %p96 = scmp.eq.s32.totalorder %s14, 0
      %p97 = por %p95, %p96
      %p98 = scmp.ne.s32.totalorder %s90, %s92
      %p99 = scmp.eq.s32.totalorder %s19, 1
      %p100 = por %p98, %p99
      %p101 = scmp.ne.s32.totalorder %s92, %s93
      %p102 = scmp.eq.s32.totalorder %s19, 0
      %p103 = por %p101, %p102
      %p104 = scmp.ne.s32.totalorder %s92, %s93
      %p105 = scmp.eq.s32.totalorder %s20, 1
      %p106 = por %p104, %p105
      %p108 = scmp.ne.s32.totalorder %s93, %s107
      %p109 = scmp.eq.s32.totalorder %s20, 0
      %p110 = por %p108, %p109
      %s112 = sadd.s32 %s111, 1
      %p115 = scmp.eq.s32.totalorder %s14, 1
      %p116 = scmp.ne.s32.totalorder %s111, %s113
      %p117 = scmp.eq.s32.totalorder %s14, 0
      %p118 = por %p116, %p117
      %p119 = scmp.ne.s32.totalorder %s111, %s113
      %p120 = scmp.eq.s32.totalorder %s19, 1
      %p121 = por %p119, %p120
      %p122 = scmp.ne.s32.totalorder %s113, %s114
      %p123 = scmp.eq.s32.totalorder %s19, 0
      %p124 = por %p122, %p123
      %p125 = scmp.ne.s32.totalorder %s113, %s114
      %p126 = scmp.eq.s32.totalorder %s20, 1
      %p127 = por %p125, %p126
      %p129 = scmp.ne.s32.totalorder %s114, %s128
      %p130 = scmp.eq.s32.totalorder %s20, 0
      %p131 = por %p129, %p130
      %s132 = ssub.s32 %s14, %s21
      %p133 = scmp.eq.s32.totalorder %s132, 0
      %s135 = sadd.s32 %s134, 1
      %s136 = scalar_select %p133, %s134, %s135
      %p139 = pneg %p133
      %p140 = scmp.eq.s32.totalorder %s14, 1
      %p141 = por %p139, %p140
      %p142 = scmp.ne.s32.totalorder %s134, %s137
      %p143 = scmp.eq.s32.totalorder %s14, 0
      %p144 = por %p142, %p143
      %p145 = scmp.ne.s32.totalorder %s134, %s137
      %p146 = scmp.eq.s32.totalorder %s19, 1
      %p147 = por %p145, %p146
      %p148 = scmp.ne.s32.totalorder %s137, %s138
      %p149 = scmp.eq.s32.totalorder %s19, 0
      %p150 = por %p148, %p149
      %p151 = scmp.ne.s32.totalorder %s137, %s138
      %p152 = scmp.eq.s32.totalorder %s20, 1
      %p153 = por %p151, %p152
      %p155 = scmp.ne.s32.totalorder %s138, %s154
      %p156 = scmp.eq.s32.totalorder %s20, 0
      %p157 = por %p155, %p156
      %p158 = scmp.le.s32.totalorder 1, %s14
      %p159 = scmp.lt.s32.totalorder %s14, 3
      %p160 = pnand %p158, %p159
      %p161 = pneg %p160
      // Predicated region
      $region9: #{basic_block_forward.1} parent=5 // pred_check
        _
      $region10: #{basic_block_forward.1} parent=5 // pred_check_branch
        %163 = sbr.rel (%p160) target = $region12
      $region11: #{basic_block_forward.1} parent=5 // pred_region
        %s164 = ssub.s32 %s14, 1
        // Predicated region
        $region13: #{basic_block_forward.1} parent=11 // pred_check
          %p165 = pneg %p61
        $region14: #{basic_block_forward.1} parent=11 // pred_check_branch
          %167 = sbr.rel (%p165) target = $region16
        $region15: #{basic_block_forward.1} parent=11 // pred_region
          _
        $region16: #{basic_block_forward.1} parent=11 // pred_fallthru
          _
        // Predicated region
        $region17: #{basic_block_forward.1} parent=11 // pred_check
          %p168 = pneg %p82
        $region18: #{basic_block_forward.1} parent=11 // pred_check_branch
          %170 = sbr.rel (%p168) target = $region20
        $region19: #{basic_block_forward.1} parent=11 // pred_region
          _
        $region20: #{basic_block_forward.1} parent=11 // pred_fallthru
          _
        // Predicated region
        $region21: #{basic_block_forward.1} parent=11 // pred_check
          %p171 = pneg %p103
        $region22: #{basic_block_forward.1} parent=11 // pred_check_branch
          %173 = sbr.rel (%p171) target = $region24
        $region23: #{basic_block_forward.1} parent=11 // pred_region
          _
        $region24: #{basic_block_forward.1} parent=11 // pred_fallthru
          _
        // Predicated region
        $region25: #{basic_block_forward.1} parent=11 // pred_check
          %p174 = pneg %p124
        $region26: #{basic_block_forward.1} parent=11 // pred_check_branch
          %176 = sbr.rel (%p174) target = $region28
        $region27: #{basic_block_forward.1} parent=11 // pred_region
          _
        $region28: #{basic_block_forward.1} parent=11 // pred_fallthru
          _
      $region12: #{basic_block_forward.1} parent=5 // pred_fallthru
        _
      %p177 = scmp.lt.s32.totalorder %s14, 2
      // Predicated region
      $region29: #{basic_block_forward.1} parent=5 // pred_check
        %p178 = pneg %p177
      $region30: #{basic_block_forward.1} parent=5 // pred_check_branch
        %180 = sbr.rel (%p178) target = $region32
      $region31: #{basic_block_forward.1} parent=5 // pred_region
        // Predicated region
        $region33: #{basic_block_forward.1} parent=31 // pred_check
          %p181 = pneg %p34
        $region34: #{basic_block_forward.1} parent=31 // pred_check_branch
          %183 = sbr.rel (%p181) target = $region36
        $region35: #{basic_block_forward.1} parent=31 // pred_region
          %s184 = smul.u32 2, %s14
          %p185 = scmp.lt.s32.totalorder %s184, 3
          %s186 = scalar_select %p185, %s184, 3
          %s187 = smul.addr %s186, 2
          %s188 = smul.addr %s187, 8
          %s189 = scalar_lea.vmem %s0, %s188
          %s190 = smul.u32 2, %s14
        $region36: #{basic_block_forward.1} parent=31 // pred_fallthru
          _
      $region32: #{basic_block_forward.1} parent=5 // pred_fallthru
        _
      %p191 = scmp.le.s32.totalorder 1, %s14
      %p192 = scmp.lt.s32.totalorder %s14, 3
      %p193 = pnand %p191, %p192
      %p194 = pneg %p193
      // Predicated region
      $region37: #{basic_block_forward.1} parent=5 // pred_check
        _
      $region38: #{basic_block_forward.1} parent=5 // pred_check_branch
        %196 = sbr.rel (%p193) target = $region40
      $region39: #{basic_block_forward.1} parent=5 // pred_region
        %s197 = ssub.s32 %s14, 1
        %s198 = smul.u32 2, %s19
        %p199 = scmp.lt.s32.totalorder %s198, 3
        %s200 = scalar_select %p199, %s198, 3
        %s201 = smul.addr %s200, 2
        %s202 = smul.addr %s201, 8
        %s203 = scalar_lea.vmem %s0, %s202
        %p204 = pneg %p40
        %p205 = pneg %p37
        %p206 = pneg %p61
        %p207 = pneg %p58
        %p208 = pneg %p82
        %p209 = pneg %p79
        %p210 = pneg %p103
        %p211 = pneg %p100
        %p212 = pneg %p124
        %p213 = pneg %p121
        %p214 = pneg %p150
        %p215 = pneg %p147
        %s216 = sand.u32 %s137, 1
        %s217 = scalar_lea.sflag [#allocation3], %s216
        %s218 = sand.u32 %s137, 1
        %s219 = smul.addr %s218, 32
        %s220 = scalar_lea.vmem [#allocation2], %s219
        %s221 = smul.u32 2, %s19
        %p222 = scmp.lt.s32.totalorder %s221, 3
        %s223 = scalar_select %p222, %s221, 3
        %s224 = smul.addr %s223, 2
        %s225 = smul.addr %s224, 8
        %s226 = scalar_lea.vmem %s0, %s225
        %s227 = smul.u32 2, %s19
        %s228 = smul.u32 2, %s19
        %v230 = vld [vmem:[%s226] sm:$0xff]
        %v231 = vld [vmem:[%s226 + $0x8] sm:$0xff]
        %s232 = scalar_lea.vmem %s226, 16
        %v233 = vld [vmem:[%s232] sm:$0xff]
        %v234 = vld [vmem:[%s232 + $0x8] sm:$0xff]
        %v235 = vpack.c.bf16 %v231, %v230
        %v236 = vpack.c.bf16 %v234, %v233
        %238 = vrot.lane.b32.xlu0 %v235, 1
        %v239 = vpop.permute.xlu0 %238
        %vm240 = vcmask 7168
        %v243 = vsel %vm240, 0, %v239
        %246 = vrot.lane.b32.xlu0 %v236, 1
        %v247 = vpop.permute.xlu0 %246
        %v249 = vsel %vm240, 0, %v247
        %251 = vrot.lane.b32.xlu0 %v235, 127
        %v252 = vpop.permute.xlu0 %251
        %vm253 = vcmask 1039360
        %v255 = vsel %vm253, %v252, 0
        %257 = vrot.lane.b32.xlu0 %v236, 127
        %v258 = vpop.permute.xlu0 %257
        %v260 = vsel %vm253, %v258, 0
        %v262 = vld [vmem:[%s1] sm:$0xf]
        %v263 = vld [vmem:[%s1 + $0x4] sm:$0xf]
        %v264 = vld [vmem:[%s2] sm:$0xff]
        %v265 = vld [vmem:[%s2 + $0x8] sm:$0xff]
        %267 = vset.pattern.permute.xlu0 0
        %268 = vperm.xlu0 %267, %v264
        %v269 = vpop.permute.xlu0 %268
        %272 = vset.pattern.permute.xlu0 0
        %273 = vperm.xlu0 %272, %v265
        %v274 = vpop.permute.xlu0 %273
        %v278 = vunpack.c.l.b16 %v262
        %v279 = vunpack.c.l.b16 %v263
        %v280 = vpack.c.b16 %v279, %v278
        %vm281 = vcmask 392192
        %v283 = vsel %vm281, %v280, 0
        %285 = vmatprep.subr.bf16.mxu0 %v249
        %286 = vmatpush1.bf16.msra.mxu0 %v243
        %287 = vmatprep.subr.bf16.mxu0 %v236
        %288 = vmatpush1.bf16.msra.mxu0 %v235
        %289 = vmatprep.subr.bf16.mxu0 %v260
        %290 = vmatpush1.bf16.msra.mxu0 %v255
        %291 = vmatprep.subr.bf16.mxu0 0
        %292 = vmatpush1.bf16.msra.mxu0 0
        %293 = vmatprep.subr.bf16.mxu0 0
        %294 = vmatpush1.bf16.msra.mxu0 0
        %295 = vmatprep.subr.bf16.mxu0 0
        %296 = vmatpush1.bf16.msra.mxu0 0
        %297 = vmatprep.subr.bf16.mxu0 0
        %298 = vmatpush1.bf16.msra.mxu0 0
        %299 = vmatprep.subr.bf16.mxu0 0
        %300 = vmatpush1.bf16.msra.mxu0 0
        %301 = vmatprep.subr.bf16.mxu0 0
        %302 = vmatpush1.bf16.msra.mxu0 0
        %303 = vmatprep.subr.bf16.mxu0 0
        %304 = vmatpush1.bf16.msra.mxu0 0
        %305 = vmatprep.subr.bf16.mxu0 0
        %306 = vmatpush1.bf16.msra.mxu0 0
        %307 = vmatprep.subr.bf16.mxu0 0
        %308 = vmatpush1.bf16.msra.mxu0 0
        %309 = vmatprep.subr.bf16.mxu0 0
        %310 = vmatpush1.bf16.msra.mxu0 0
        %311 = vmatprep.subr.bf16.mxu0 0
        %312 = vmatpush1.bf16.msra.mxu0 0
        %313 = vmatprep.subr.bf16.mxu0 0
        %314 = vmatpush1.bf16.msra.mxu0 0
        %315 = vmatprep.subr.bf16.mxu0 0
        %316 = vmatpush1.bf16.msra.mxu0 0
        %317 = vmatprep.mubr.bf16.mxu0 0
        %318 = vmatmul.mubr.bf16.gmra.mrb[0].mxu0 %v283
        %v319 = vpop.f32.mrb[0].mxu0
        %v320 = vadd.f32 %v269, %v319
        %v321 = vpop.f32.mrb[0].mxu0
        %v322 = vadd.f32 %v269, %v321
        %v323 = vpop.f32.mrb[0].mxu0
        %v324 = vadd.f32 %v274, %v323
        %v325 = vpop.f32.mrb[0].mxu0
        %v326 = vadd.f32 %v274, %v325
        %327 = vdwg.mxu0
        %vm328 = vcmp.gt.f32.partialorder %v320, 0.0
        %vm329 = vcmp.gt.f32.partialorder %v322, 0.0
        %vm330 = vcmp.gt.f32.partialorder %v324, 0.0
        %vm331 = vcmp.gt.f32.partialorder %v326, 0.0
        %v332 = vmul.f32 %v320, 0.01
        %v333 = vmul.f32 %v322, 0.01
        %v334 = vmul.f32 %v324, 0.01
        %v335 = vmul.f32 %v326, 0.01
        %v336 = vsel %vm328, %v320, %v332
        %v337 = vsel %vm329, %v322, %v333
        %v338 = vsel %vm330, %v324, %v334
        %v339 = vsel %vm331, %v326, %v335
        %v340 = vpack.c.bf16 %v338, %v336
        %v341 = vpack.c.bf16 %v339, %v337
        %343 = vrot.lane.b32.xlu0 %v340, 1
        %v344 = vpop.permute.xlu0 %343
        %v346 = vsel %vm240, 0, %v344
        %349 = vrot.lane.b32.xlu0 %v341, 1
        %v350 = vpop.permute.xlu0 %349
        %v352 = vsel %vm240, 0, %v350
        %354 = vrot.lane.b32.xlu0 %v340, 127
        %v355 = vpop.permute.xlu0 %354
        %v357 = vsel %vm253, %v355, 0
        %359 = vrot.lane.b32.xlu0 %v341, 127
        %v360 = vpop.permute.xlu0 %359
        %v362 = vsel %vm253, %v360, 0
        %v364 = vld [vmem:[%s3] sm:$0xf]
        %v365 = vld [vmem:[%s3 + $0x4] sm:$0xf]
        %v366 = vld [vmem:[%s4] sm:$0xff]
        %v367 = vld [vmem:[%s4 + $0x8] sm:$0xff]
        %369 = vset.pattern.permute.xlu0 0
        %370 = vperm.xlu0 %369, %v366
        %v371 = vpop.permute.xlu0 %370
        %374 = vset.pattern.permute.xlu0 0
        %375 = vperm.xlu0 %374, %v367
        %v376 = vpop.permute.xlu0 %375
        %v380 = vunpack.c.l.b16 %v364
        %v381 = vunpack.c.l.b16 %v365
        %v382 = vpack.c.b16 %v381, %v380
        %v384 = vsel %vm281, %v382, 0
        %386 = vmatprep.subr.bf16.mxu0 %v352
        %387 = vmatpush1.bf16.msra.mxu0 %v346
        %388 = vmatprep.subr.bf16.mxu0 %v341
        %389 = vmatpush1.bf16.msra.mxu0 %v340
        %390 = vmatprep.subr.bf16.mxu0 %v362
        %391 = vmatpush1.bf16.msra.mxu0 %v357
        %392 = vmatprep.subr.bf16.mxu0 0
        %393 = vmatpush1.bf16.msra.mxu0 0
        %394 = vmatprep.subr.bf16.mxu0 0
        %395 = vmatpush1.bf16.msra.mxu0 0
        %396 = vmatprep.subr.bf16.mxu0 0
        %397 = vmatpush1.bf16.msra.mxu0 0
        %398 = vmatprep.subr.bf16.mxu0 0
        %399 = vmatpush1.bf16.msra.mxu0 0
        %400 = vmatprep.subr.bf16.mxu0 0
        %401 = vmatpush1.bf16.msra.mxu0 0
        %402 = vmatprep.subr.bf16.mxu0 0
        %403 = vmatpush1.bf16.msra.mxu0 0
        %404 = vmatprep.subr.bf16.mxu0 0
        %405 = vmatpush1.bf16.msra.mxu0 0
        %406 = vmatprep.subr.bf16.mxu0 0
        %407 = vmatpush1.bf16.msra.mxu0 0
        %408 = vmatprep.subr.bf16.mxu0 0
        %409 = vmatpush1.bf16.msra.mxu0 0
        %410 = vmatprep.subr.bf16.mxu0 0
        %411 = vmatpush1.bf16.msra.mxu0 0
        %412 = vmatprep.subr.bf16.mxu0 0
        %413 = vmatpush1.bf16.msra.mxu0 0
        %414 = vmatprep.subr.bf16.mxu0 0
        %415 = vmatpush1.bf16.msra.mxu0 0
        %416 = vmatprep.subr.bf16.mxu0 0
        %417 = vmatpush1.bf16.msra.mxu0 0
        %418 = vmatprep.mubr.bf16.mxu0 0
        %419 = vmatmul.mubr.bf16.gmra.mrb[0].mxu0 %v384
        %v420 = vpop.f32.mrb[0].mxu0
        %v421 = vadd.f32 %v371, %v420
        %v422 = vpop.f32.mrb[0].mxu0
        %v423 = vadd.f32 %v371, %v422
        %v424 = vpop.f32.mrb[0].mxu0
        %v425 = vadd.f32 %v376, %v424
        %v426 = vpop.f32.mrb[0].mxu0
        %v427 = vadd.f32 %v376, %v426
        %428 = vdwg.mxu0
        %v429 = vadd.f32 %v421, %v230
        %v430 = vadd.f32 %v425, %v231
        %vm431 = vcmp.gt.f32.partialorder %v429, 0.0
        %vm432 = vcmp.gt.f32.partialorder %v430, 0.0
        %v433 = vmul.f32 %v429, 0.01
        %v434 = vmul.f32 %v430, 0.01
        %v435 = vsel %vm431, %v429, %v433
        %v436 = vsel %vm432, %v430, %v434
        %437 = vst [vmem:[%s220] sm:$0xff] %v435
        %438 = vst [vmem:[%s220 + $0x8] sm:$0xff] %v436
        %v439 = vadd.f32 %v423, %v233
        %v440 = vadd.f32 %v427, %v234
        %vm441 = vcmp.gt.f32.partialorder %v439, 0.0
        %vm442 = vcmp.gt.f32.partialorder %v440, 0.0
        %v443 = vmul.f32 %v439, 0.01
        %v444 = vmul.f32 %v440, 0.01
        %v445 = vsel %vm441, %v439, %v443
        %v446 = vsel %vm442, %v440, %v444
        %s447 = scalar_lea.vmem %s220, 16 [#allocation2]
        %448 = vst [vmem:[%s447] sm:$0xff] %v445
        %449 = vst [vmem:[%s447 + $0x8] sm:$0xff] %v446
        %s450 = sand.u32 %s137, 1
        %s451 = scalar_lea.sflag [#allocation3], %s450
        %s452 = sand.u32 %s137, 1
        %s453 = smul.addr %s452, 32
        %s454 = scalar_lea.vmem [#allocation2], %s453
        // Predicated region
        $region41: #{basic_block_forward.1} parent=39 // pred_check
          %p455 = pneg %p147
        $region42: #{basic_block_forward.1} parent=39 // pred_check_branch
          %457 = sbr.rel (%p455) target = $region44
        $region43: #{basic_block_forward.1} parent=39 // pred_region
          %s458 = smul.u32 2, %s19
          %s460 = ssub.s32 512, 512
          %461 = vsyncadd %s451, %s460
          %s462 = smul.addr %s458, 2
          %s463 = smul.addr %s462, 128
          %s464 = scalar_lea.hbm %s5, %s463
          %s465 = sshll.u32 %s454, 4
          %s466 = int_to_ptr.vmem [resolvable:$true] %s465
          %471 = dma.vmem_to_hbm [thread:$0]  %s466, 512, %s464, %s451, 128, 128, 8
        $region44: #{basic_block_forward.1} parent=39 // pred_fallthru
          _
      $region40: #{basic_block_forward.1} parent=5 // pred_fallthru
        _
      %p472 = scmp.le.s32.totalorder 2, %s14
      // Predicated region
      $region45: #{basic_block_forward.1} parent=5 // pred_check
        %p473 = pneg %p472
      $region46: #{basic_block_forward.1} parent=5 // pred_check_branch
        %475 = sbr.rel (%p473) target = $region48
      $region47: #{basic_block_forward.1} parent=5 // pred_region
        %s476 = ssub.s32 %s14, 2
        // Predicated region
        $region49: #{basic_block_forward.1} parent=47 // pred_check
          %p477 = pneg %p153
        $region50: #{basic_block_forward.1} parent=47 // pred_check_branch
          %479 = sbr.rel (%p477) target = $region52
        $region51: #{basic_block_forward.1} parent=47 // pred_region
          %s480 = sand.u32 %s138, 1
          %s481 = scalar_lea.sflag [#allocation3], %s480
          %s482 = sand.u32 %s138, 1
          %s483 = smul.addr %s482, 32
          %s484 = scalar_lea.vmem [#allocation2], %s483
          %485 = dma.done %s481, 512
        $region52: #{basic_block_forward.1} parent=47 // pred_fallthru
          _
      $region48: #{basic_block_forward.1} parent=5 // pred_fallthru
        _
    $region6: #{basic_block_forward.1} parent=1 // loop_footer
      %s18 = sadd.s32 1, %s14
    $region7: #{basic_block_forward.1} parent=1 // loop_footer_branch
      %13 = sbr.rel target = $region3
    $region8: #{basic_block_forward.1} parent=1 // loop_exit
      _
    %486 = vsyncpa [#allocation3], 1
    %s487 = scalar_lea.sflag [#allocation3], 1
    %488 = vsyncpa %s487, 1

</llo_original>
